<compile_context>
chip_gen: v7x
topology: tpu7x:2x2x1
jax: 0.10.0
libtpu: 0.0.40
codegen_flags: <defaults>
</compile_context>

<pallas_src>
import jax
import jax.numpy as jnp
from jax.experimental import pallas as pl
from jax.experimental.pallas import tpu as pltpu

LANE = 128
SUBLANE = 8


def _round_up(n, m):
    return ((n + m - 1) // m) * m


def _pad2d(a, rows, cols):
    r, c = a.shape
    if r == rows and c == cols:
        return a
    return jnp.pad(a, ((0, rows - r), (0, cols - c)))


def _mlp_kernel(x_ref, w1_ref, b1_ref, w2_ref, b2_ref, w3_ref, b3_ref, o_ref):
    # Fused 3-layer MLP: MXU matmuls with f32 accumulation, VPU bias+ReLU.
    x = x_ref[...]
    h1 = jnp.dot(x, w1_ref[...], preferred_element_type=jnp.float32) + b1_ref[...]
    h1 = jnp.maximum(h1, 0.0)
    h2 = jnp.dot(h1.astype(w2_ref.dtype), w2_ref[...],
                 preferred_element_type=jnp.float32) + b2_ref[...]
    h2 = jnp.maximum(h2, 0.0)
    o_ref[...] = (
        jnp.dot(h2.astype(w3_ref.dtype), w3_ref[...],
                preferred_element_type=jnp.float32) + b3_ref[...]
    )


def prepare_params(params, matmul_dtype=jnp.float32):
    """One-time layout plumbing: weights stored as (in, out), hidden/class dims padded
    to 128 lanes with exact zeros, matmul operands cast to `matmul_dtype`.
    Biases stay f32 (added after the f32-accumulated dot)."""
    D, H1 = params["w1"].shape
    H2 = params["w2"].shape[1]
    C = params["w3"].shape[1]
    H1p, H2p, Cp = (_round_up(n, LANE) for n in (H1, H2, C))
    prep = {
        "w1": _pad2d(params["w1"].astype(matmul_dtype), D, H1p),   # K=42 left unpadded
        "b1": _pad2d(params["b1"].reshape(1, -1).astype(jnp.float32), 1, H1p),
        "w2": _pad2d(params["w2"].astype(matmul_dtype), H1p, H2p),
        "b2": _pad2d(params["b2"].reshape(1, -1).astype(jnp.float32), 1, H2p),
        "w3": _pad2d(params["w3"].astype(matmul_dtype), H2p, Cp),
        "b3": _pad2d(params["b3"].reshape(1, -1).astype(jnp.float32), 1, Cp),
    }
    return prep, C


def hand_gesture_forward(x, prepared, num_classes, *, tb=None,
                         matmul_dtype=jnp.float32):
    """x: (B, input_size) f32.  prepared: output of prepare_params (padded (in,out)
    weights).  Returns (B, num_classes)."""
    B, D = x.shape
    H1p = prepared["w1"].shape[1]
    H2p = prepared["w2"].shape[1]
    Cp = prepared["w3"].shape[1]
    assert prepared["w1"].shape[0] == D

    # Batch tile: >=2 grid steps whenever B allows it (both v7x TCs busy via the
    # "parallel" axis), capped at 1024 rows to amortize per-step overhead at large B.
    if tb is None:
        tb = max(SUBLANE, min(1024, _round_up(pl.cdiv(B, 2), SUBLANE)))
    else:
        tb = max(SUBLANE, _round_up(int(tb), SUBLANE))
    grid = (pl.cdiv(B, tb),)  # no batch padding: Pallas masks the ragged last block

    xp = x if x.dtype == matmul_dtype else x.astype(matmul_dtype)

    # Constant block index -> weights/biases DMA'd once, stay VMEM-resident (~115 KB).
    full = lambda shape: pl.BlockSpec(shape, lambda i, _s=len(shape): (0,) * _s)

    flops = 2 * B * (D * H1p + H1p * H2p + H2p * Cp)
    bytes_accessed = (
        xp.dtype.itemsize * B * D
        + prepared["w1"].dtype.itemsize * (D * H1p + H1p * H2p + H2p * Cp)
        + 4 * B * Cp
    )

    out = pl.pallas_call(
        _mlp_kernel,
        out_shape=jax.ShapeDtypeStruct((B, Cp), jnp.float32),
        grid_spec=pltpu.PrefetchScalarGridSpec(
            num_scalar_prefetch=0,
            grid=grid,
            in_specs=[
                pl.BlockSpec((tb, D), lambda i: (i, 0)),  # x tile, feature dim unpadded
                full((D, H1p)),                           # w1
                full((1, H1p)),                           # b1
                full((H1p, H2p)),                         # w2
                full((1, H2p)),                           # b2
                full((H2p, Cp)),                          # w3
                full((1, Cp)),                            # b3
            ],
            out_specs=pl.BlockSpec((tb, Cp), lambda i: (i, 0)),  # lane-dense output
        ),
        compiler_params=pltpu.CompilerParams(
            dimension_semantics=("parallel",),
        ),
        cost_estimate=pl.CostEstimate(
            flops=flops, transcendentals=0, bytes_accessed=bytes_accessed
        ),
    )(xp, prepared["w1"], prepared["b1"], prepared["w2"], prepared["b2"],
      prepared["w3"], prepared["b3"])

    # Padded class columns are exact zeros; slice back to the logical width.
    return out[:, :num_classes]


def init_params(key, input_size, num_classes):
    """PyTorch nn.Linear-style init: U(-1/sqrt(fan_in), 1/sqrt(fan_in)); weights (in, out)."""
    dims = [(input_size, 128), (128, 64), (64, num_classes)]
    params = {}
    for idx, (fan_in, fan_out) in enumerate(dims, start=1):
        key, kw, kb = jax.random.split(key, 3)
        bound = 1.0 / jnp.sqrt(jnp.float32(fan_in))
        params[f"w{idx}"] = jax.random.uniform(
            kw, (fan_in, fan_out), jnp.float32, minval=-bound, maxval=bound
        )
        params[f"b{idx}"] = jax.random.uniform(
            kb, (1, fan_out), jnp.float32, minval=-bound, maxval=bound
        )
    return params


if __name__ == "__main__":
    key = jax.random.PRNGKey(0)
    batch = 30            # deliberately not a multiple of 8: exercises the masked last block
    input_size = 42       # 21 hand landmarks x 2 coords
    num_classes = 10

    key, kx = jax.random.split(key)
    x = jax.random.normal(kx, (batch, input_size), jnp.float32)
    params = init_params(key, input_size, num_classes)

    # One-time padding/cast of the weights; f32 matmul operands (matmul_dtype=jnp.bfloat16
    # is the bandwidth option for v6e/v7x if accuracy budget allows).
    prepared, n_cls = prepare_params(params, matmul_dtype=jnp.float32)

    out = hand_gesture_forward(x, prepared, n_cls)
    out = jax.block_until_ready(out)

    # Plain-JAX reference (same math as the PyTorch forward), unpadded.
    h1 = jnp.maximum(x @ params["w1"] + params["b1"], 0.0)
    h2 = jnp.maximum(h1 @ params["w2"] + params["b2"], 0.0)
    ref = h2 @ params["w3"] + params["b3"]

    assert out.shape == (batch, num_classes)
    assert jnp.allclose(out, ref, atol=1e-4, rtol=1e-4)

    print("KERNEL_OK")
</pallas_src>

<mosaic_0001>
module attributes {stable_mosaic.version = 11 : i64} {
  func.func @_mlp_kernel(%arg0: i32, %arg1: memref<16x42xf32, #tpu.memory_space<vmem>>, %arg2: memref<42x128xf32, #tpu.memory_space<vmem>>, %arg3: memref<1x128xf32, #tpu.memory_space<vmem>>, %arg4: memref<128x128xf32, #tpu.memory_space<vmem>>, %arg5: memref<1x128xf32, #tpu.memory_space<vmem>>, %arg6: memref<128x128xf32, #tpu.memory_space<vmem>>, %arg7: memref<1x128xf32, #tpu.memory_space<vmem>>, %arg8: memref<16x128xf32, #tpu.memory_space<vmem>>) attributes {dimension_semantics = [#tpu.dimension_semantics<parallel>], iteration_bounds = array<i64: 2>, scalar_prefetch = 0 : i64, scratch_operands = 0 : i64, tpu.core_type = #tpu.core_type<tc>, window_params = [{transform_indices = @transform_0, window_bounds = array<i64: 16, 42>}, {pipeline_mode = #tpu.pipeline_mode<synchronous>, transform_indices = @transform_1, window_bounds = array<i64: 42, 128>}, {pipeline_mode = #tpu.pipeline_mode<synchronous>, transform_indices = @transform_2, window_bounds = array<i64: 1, 128>}, {pipeline_mode = #tpu.pipeline_mode<synchronous>, transform_indices = @transform_3, window_bounds = array<i64: 128, 128>}, {pipeline_mode = #tpu.pipeline_mode<synchronous>, transform_indices = @transform_4, window_bounds = array<i64: 1, 128>}, {pipeline_mode = #tpu.pipeline_mode<synchronous>, transform_indices = @transform_5, window_bounds = array<i64: 128, 128>}, {pipeline_mode = #tpu.pipeline_mode<synchronous>, transform_indices = @transform_6, window_bounds = array<i64: 1, 128>}, {transform_indices = @transform_7, window_bounds = array<i64: 16, 128>}]} {
    %c0 = arith.constant 0 : index
    %c0_0 = arith.constant 0 : index
    %0 = vector.load %arg1[%c0, %c0_0] : memref<16x42xf32, #tpu.memory_space<vmem>>, vector<16x42xf32>
    %c0_1 = arith.constant 0 : index
    %c0_2 = arith.constant 0 : index
    %1 = vector.load %arg2[%c0_1, %c0_2] : memref<42x128xf32, #tpu.memory_space<vmem>>, vector<42x128xf32>
    %cst = arith.constant dense<0.000000e+00> : vector<16x128xf32>
    %2 = tpu.matmul %0, %1, %cst {dimension_numbers = #tpu.dot_dimension_numbers<[1], [0], [0], [1], [0, 0, 1, 1], [], []>} : vector<16x42xf32>, vector<42x128xf32>, vector<16x128xf32> -> vector<16x128xf32>
    %c0_3 = arith.constant 0 : index
    %c0_4 = arith.constant 0 : index
    %3 = vector.load %arg3[%c0_3, %c0_4] : memref<1x128xf32, #tpu.memory_space<vmem>>, vector<1x128xf32>
    %4 = vector.broadcast %3 : vector<1x128xf32> to vector<16x128xf32>
    %5 = arith.addf %2, %4 : vector<16x128xf32>
    %cst_5 = arith.constant 0.000000e+00 : f32
    %6 = vector.broadcast %cst_5 : f32 to vector<16x128xf32>
    %7 = arith.maximumf %5, %6 : vector<16x128xf32>
    %c0_6 = arith.constant 0 : index
    %c0_7 = arith.constant 0 : index
    %8 = vector.load %arg4[%c0_6, %c0_7] : memref<128x128xf32, #tpu.memory_space<vmem>>, vector<128x128xf32>
    %cst_8 = arith.constant dense<0.000000e+00> : vector<16x128xf32>
    %9 = tpu.matmul %7, %8, %cst_8 {dimension_numbers = #tpu.dot_dimension_numbers<[1], [0], [0], [1], [0, 0, 1, 1], [], []>} : vector<16x128xf32>, vector<128x128xf32>, vector<16x128xf32> -> vector<16x128xf32>
    %c0_9 = arith.constant 0 : index
    %c0_10 = arith.constant 0 : index
    %10 = vector.load %arg5[%c0_9, %c0_10] : memref<1x128xf32, #tpu.memory_space<vmem>>, vector<1x128xf32>
    %11 = vector.broadcast %10 : vector<1x128xf32> to vector<16x128xf32>
    %12 = arith.addf %9, %11 : vector<16x128xf32>
    %cst_11 = arith.constant 0.000000e+00 : f32
    %13 = vector.broadcast %cst_11 : f32 to vector<16x128xf32>
    %14 = arith.maximumf %12, %13 : vector<16x128xf32>
    %c0_12 = arith.constant 0 : index
    %c0_13 = arith.constant 0 : index
    %15 = vector.load %arg6[%c0_12, %c0_13] : memref<128x128xf32, #tpu.memory_space<vmem>>, vector<128x128xf32>
    %cst_14 = arith.constant dense<0.000000e+00> : vector<16x128xf32>
    %16 = tpu.matmul %14, %15, %cst_14 {dimension_numbers = #tpu.dot_dimension_numbers<[1], [0], [0], [1], [0, 0, 1, 1], [], []>} : vector<16x128xf32>, vector<128x128xf32>, vector<16x128xf32> -> vector<16x128xf32>
    %c0_15 = arith.constant 0 : index
    %c0_16 = arith.constant 0 : index
    %17 = vector.load %arg7[%c0_15, %c0_16] : memref<1x128xf32, #tpu.memory_space<vmem>>, vector<1x128xf32>
    %18 = vector.broadcast %17 : vector<1x128xf32> to vector<16x128xf32>
    %19 = arith.addf %16, %18 : vector<16x128xf32>
    %c0_17 = arith.constant 0 : index
    %c0_18 = arith.constant 0 : index
    %20 = vector.load %arg8[%c0_17, %c0_18] : memref<16x128xf32, #tpu.memory_space<vmem>>, vector<16x128xf32>
    tpu.vector_store %arg8[%c0_17, %c0_18], %19 {strides = array<i32>} : memref<16x128xf32, #tpu.memory_space<vmem>>, vector<16x128xf32>,
    return
  }
  func.func @transform_0(%arg0: i32) -> (i32, i32) {
    %c0_i32 = arith.constant 0 : i32
    %c0_i32_0 = arith.constant 0 : i32
    return %arg0, %c0_i32 : i32, i32
  }
  func.func @transform_1(%arg0: i32) -> (i32, i32) {
    %c0_i32 = arith.constant 0 : i32
    %c0_i32_0 = arith.constant 0 : i32
    %c0_i32_1 = arith.constant 0 : i32
    return %c0_i32, %c0_i32_0 : i32, i32
  }
  func.func @transform_2(%arg0: i32) -> (i32, i32) {
    %c0_i32 = arith.constant 0 : i32
    %c0_i32_0 = arith.constant 0 : i32
    %c0_i32_1 = arith.constant 0 : i32
    return %c0_i32, %c0_i32_0 : i32, i32
  }
  func.func @transform_3(%arg0: i32) -> (i32, i32) {
    %c0_i32 = arith.constant 0 : i32
    %c0_i32_0 = arith.constant 0 : i32
    %c0_i32_1 = arith.constant 0 : i32
    return %c0_i32, %c0_i32_0 : i32, i32
  }
  func.func @transform_4(%arg0: i32) -> (i32, i32) {
    %c0_i32 = arith.constant 0 : i32
    %c0_i32_0 = arith.constant 0 : i32
    %c0_i32_1 = arith.constant 0 : i32
    return %c0_i32, %c0_i32_0 : i32, i32
  }
  func.func @transform_5(%arg0: i32) -> (i32, i32) {
    %c0_i32 = arith.constant 0 : i32
    %c0_i32_0 = arith.constant 0 : i32
    %c0_i32_1 = arith.constant 0 : i32
    return %c0_i32, %c0_i32_0 : i32, i32
  }
  func.func @transform_6(%arg0: i32) -> (i32, i32) {
    %c0_i32 = arith.constant 0 : i32
    %c0_i32_0 = arith.constant 0 : i32
    %c0_i32_1 = arith.constant 0 : i32
    return %c0_i32, %c0_i32_0 : i32, i32
  }
  func.func @transform_7(%arg0: i32) -> (i32, i32) {
    %c0_i32 = arith.constant 0 : i32
    %c0_i32_0 = arith.constant 0 : i32
    return %arg0, %c0_i32 : i32, i32
  }
}

</mosaic_0001>

<llo_original>
// kernel: tpu_custom_call.1
$region0: #{tpu_custom_call.1}
  #allocation0 [shape = 'u32[]', space=smem, size = 0x4, offset = 0x4, fixed_abs, tag = 'smem constant byte address 0x4 - core index']
  #allocation1 [shape = 'u32[144,128]{1,0:T(1,128)}', space=vmem, size = 0x12000, scoped, tag = 'internal scratch']
  %s0 = inlined_call_operand.hbm [shape: f32[30,42], index: 0, kind: input, shape index: {}]
  %s1 = inlined_call_operand.hbm [shape: f32[42,128], index: 1, kind: input, shape index: {}]
  %s2 = inlined_call_operand.vmem [shape: f32[1,128], index: 2, kind: input, shape index: {}]
  %s3 = inlined_call_operand.hbm [shape: f32[128,128], index: 3, kind: input, shape index: {}]
  %s4 = inlined_call_operand.vmem [shape: f32[1,128], index: 4, kind: input, shape index: {}]
  %s5 = inlined_call_operand.hbm [shape: f32[128,128], index: 5, kind: input, shape index: {}]
  %s6 = inlined_call_operand.vmem [shape: f32[1,128], index: 6, kind: input, shape index: {}]
  %s7 = inlined_call_operand.hbm [shape: f32[30,128], index: 7, kind: output, shape index: {}]
  %s8 = sld [smem:[#allocation0]]
  $region77: #{tpu_custom_call.1} parent=0
    _
  %s10 = ssub.s32 1, %s8
  %s11 = scalar_select 0, %s10, %s8
  $region1: #{tpu_custom_call.1} parent=0
    #allocation2 [shape = 'u8[16384]{0}', space=vmem, size = 0x4000, scoped, tag = 'input window, operand 0']
    #allocation3 [shape = 's32[2]{0}', space=sflag, size = 0x8, scoped, tag = 'scoped memory for tpu_custom_call.1']
    #allocation4 [shape = 's32[2]{0}', space=sflag, size = 0x8, scoped, tag = 'scoped memory for tpu_custom_call.1']
    #allocation5 [shape = 'u8[24576]{0}', space=vmem, size = 0x6000, scoped, tag = 'input window, operand 1, single buffered']
    #allocation6 [shape = 's32[1]{0}', space=sflag, size = 0x4, scoped, tag = 'scoped memory for tpu_custom_call.1']
    #allocation7 [shape = 'u8[65536]{0}', space=vmem, size = 0x10000, scoped, tag = 'input window, operand 3, single buffered']
    #allocation8 [shape = 'u8[65536]{0}', space=vmem, size = 0x10000, scoped, tag = 'input window, operand 5, single buffered']
    #allocation9 [shape = 's32[1]{0}', space=sflag, size = 0x4, scoped, tag = 'scoped memory for tpu_custom_call.1']
    #allocation10 [shape = 'u8[16384]{0}', space=vmem, size = 0x4000, scoped, tag = 'output window, operand 0']
    %12 = vsyncpa [#allocation3], 0
    %s13 = scalar_lea.sflag [#allocation3], 1
    %14 = vsyncpa %s13, 0
    %15 = vsyncpa [#allocation6], 0
    %16 = vsyncpa [#allocation9], 0
    %17 = vsyncpa [#allocation4], 0
    %s18 = scalar_lea.sflag [#allocation4], 1
    %19 = vsyncpa %s18, 0
    loop: start=0, step=1, limit=4
    $region2: #{tpu_custom_call.1} parent=1 // loop_pre_header
      _
    $region3: #{tpu_custom_call.1} parent=1 // loop_header
      %s21 = sphi 0, %s25
      %p22 = scmp.ge.s32.totalorder %s21, 4
      %s31 = sphi 0, %s33
      %s34 = sphi 0, %s31
      %s35 = sphi 0, %s34
      %s51 = sphi 0, %s35
      %s55 = sphi 0, %s55
      %s57 = sphi 0, %s55
      %s58 = sphi 0, %s57
      %s72 = sphi 0, %s58
      %s76 = sphi 0, %s76
      %s78 = sphi 0, %s76
      %s79 = sphi 0, %s78
      %s93 = sphi 0, %s79
      %s97 = sphi 0, %s97
      %s99 = sphi 0, %s97
      %s100 = sphi 0, %s99
      %s114 = sphi 0, %s100
      %s118 = sphi 0, %s118
      %s120 = sphi 0, %s118
      %s121 = sphi 0, %s120
      %s135 = sphi 0, %s121
      %s139 = sphi 0, %s139
      %s141 = sphi 0, %s139
      %s142 = sphi 0, %s141
      %s156 = sphi 0, %s142
      %s160 = sphi 0, %s160
      %s162 = sphi 0, %s160
      %s163 = sphi 0, %s162
      %s177 = sphi 0, %s163
      %s183 = sphi 0, %s185
      %s186 = sphi 0, %s183
      %s187 = sphi 0, %s186
      %s203 = sphi 0, %s187
    $region4: #{tpu_custom_call.1} parent=1 // loop_header_branch
      %24 = sbr.rel (%p22) target = $region8
    $region5: #{tpu_custom_call.1} parent=1 // loop_body
      %s26 = ssub.s32 %s21, 1
      %s27 = ssub.s32 %s21, 2
      %s28 = sadd.s32 %s21, 1
      %s29 = ssub.s32 %s21, %s28
      %p30 = scmp.eq.s32.totalorder %s29, 0
      %s32 = sadd.s32 %s31, 1
      %s33 = scalar_select %p30, %s31, %s32
      %p36 = pneg %p30
      %p37 = scmp.eq.s32.totalorder %s21, 1
      %p38 = por %p36, %p37
      %p39 = scmp.ne.s32.totalorder %s31, %s34
      %p40 = scmp.eq.s32.totalorder %s21, 0
      %p41 = por %p39, %p40
      %p42 = scmp.ne.s32.totalorder %s31, %s34
      %p43 = scmp.eq.s32.totalorder %s26, 1
      %p44 = por %p42, %p43
      %p45 = scmp.ne.s32.totalorder %s34, %s35
      %p46 = scmp.eq.s32.totalorder %s26, 0
      %p47 = por %p45, %p46
      %p48 = scmp.ne.s32.totalorder %s34, %s35
      %p49 = scmp.eq.s32.totalorder %s27, 1
      %p50 = por %p48, %p49
      %p52 = scmp.ne.s32.totalorder %s35, %s51
      %p53 = scmp.eq.s32.totalorder %s27, 0
      %p54 = por %p52, %p53
      %s56 = sadd.s32 %s55, 1
      %p59 = scmp.eq.s32.totalorder %s21, 1
      %p60 = scmp.ne.s32.totalorder %s55, %s57
      %p61 = scmp.eq.s32.totalorder %s21, 0
      %p62 = por %p60, %p61
      %p63 = scmp.ne.s32.totalorder %s55, %s57
      %p64 = scmp.eq.s32.totalorder %s26, 1
      %p65 = por %p63, %p64
      %p66 = scmp.ne.s32.totalorder %s57, %s58
      %p67 = scmp.eq.s32.totalorder %s26, 0
      %p68 = por %p66, %p67
      %p69 = scmp.ne.s32.totalorder %s57, %s58
      %p70 = scmp.eq.s32.totalorder %s27, 1
      %p71 = por %p69, %p70
      %p73 = scmp.ne.s32.totalorder %s58, %s72
      %p74 = scmp.eq.s32.totalorder %s27, 0
      %p75 = por %p73, %p74
      %s77 = sadd.s32 %s76, 1
      %p80 = scmp.eq.s32.totalorder %s21, 1
      %p81 = scmp.ne.s32.totalorder %s76, %s78
      %p82 = scmp.eq.s32.totalorder %s21, 0
      %p83 = por %p81, %p82
      %p84 = scmp.ne.s32.totalorder %s76, %s78
      %p85 = scmp.eq.s32.totalorder %s26, 1
      %p86 = por %p84, %p85
      %p87 = scmp.ne.s32.totalorder %s78, %s79
      %p88 = scmp.eq.s32.totalorder %s26, 0
      %p89 = por %p87, %p88
      %p90 = scmp.ne.s32.totalorder %s78, %s79
      %p91 = scmp.eq.s32.totalorder %s27, 1
      %p92 = por %p90, %p91
      %p94 = scmp.ne.s32.totalorder %s79, %s93
      %p95 = scmp.eq.s32.totalorder %s27, 0
      %p96 = por %p94, %p95
      %s98 = sadd.s32 %s97, 1
      %p101 = scmp.eq.s32.totalorder %s21, 1
      %p102 = scmp.ne.s32.totalorder %s97, %s99
      %p103 = scmp.eq.s32.totalorder %s21, 0
      %p104 = por %p102, %p103
      %p105 = scmp.ne.s32.totalorder %s97, %s99
      %p106 = scmp.eq.s32.totalorder %s26, 1
      %p107 = por %p105, %p106
      %p108 = scmp.ne.s32.totalorder %s99, %s100
      %p109 = scmp.eq.s32.totalorder %s26, 0
      %p110 = por %p108, %p109
      %p111 = scmp.ne.s32.totalorder %s99, %s100
      %p112 = scmp.eq.s32.totalorder %s27, 1
      %p113 = por %p111, %p112
      %p115 = scmp.ne.s32.totalorder %s100, %s114
      %p116 = scmp.eq.s32.totalorder %s27, 0
      %p117 = por %p115, %p116
      %s119 = sadd.s32 %s118, 1
      %p122 = scmp.eq.s32.totalorder %s21, 1
      %p123 = scmp.ne.s32.totalorder %s118, %s120
      %p124 = scmp.eq.s32.totalorder %s21, 0
      %p125 = por %p123, %p124
      %p126 = scmp.ne.s32.totalorder %s118, %s120
      %p127 = scmp.eq.s32.totalorder %s26, 1
      %p128 = por %p126, %p127
      %p129 = scmp.ne.s32.totalorder %s120, %s121
      %p130 = scmp.eq.s32.totalorder %s26, 0
      %p131 = por %p129, %p130
      %p132 = scmp.ne.s32.totalorder %s120, %s121
      %p133 = scmp.eq.s32.totalorder %s27, 1
      %p134 = por %p132, %p133
      %p136 = scmp.ne.s32.totalorder %s121, %s135
      %p137 = scmp.eq.s32.totalorder %s27, 0
      %p138 = por %p136, %p137
      %s140 = sadd.s32 %s139, 1
      %p143 = scmp.eq.s32.totalorder %s21, 1
      %p144 = scmp.ne.s32.totalorder %s139, %s141
      %p145 = scmp.eq.s32.totalorder %s21, 0
      %p146 = por %p144, %p145
      %p147 = scmp.ne.s32.totalorder %s139, %s141
      %p148 = scmp.eq.s32.totalorder %s26, 1
      %p149 = por %p147, %p148
      %p150 = scmp.ne.s32.totalorder %s141, %s142
      %p151 = scmp.eq.s32.totalorder %s26, 0
      %p152 = por %p150, %p151
      %p153 = scmp.ne.s32.totalorder %s141, %s142
      %p154 = scmp.eq.s32.totalorder %s27, 1
      %p155 = por %p153, %p154
      %p157 = scmp.ne.s32.totalorder %s142, %s156
      %p158 = scmp.eq.s32.totalorder %s27, 0
      %p159 = por %p157, %p158
      %s161 = sadd.s32 %s160, 1
      %p164 = scmp.eq.s32.totalorder %s21, 1
      %p165 = scmp.ne.s32.totalorder %s160, %s162
      %p166 = scmp.eq.s32.totalorder %s21, 0
      %p167 = por %p165, %p166
      %p168 = scmp.ne.s32.totalorder %s160, %s162
      %p169 = scmp.eq.s32.totalorder %s26, 1
      %p170 = por %p168, %p169
      %p171 = scmp.ne.s32.totalorder %s162, %s163
      %p172 = scmp.eq.s32.totalorder %s26, 0
      %p173 = por %p171, %p172
      %p174 = scmp.ne.s32.totalorder %s162, %s163
      %p175 = scmp.eq.s32.totalorder %s27, 1
      %p176 = por %p174, %p175
      %p178 = scmp.ne.s32.totalorder %s163, %s177
      %p179 = scmp.eq.s32.totalorder %s27, 0
      %p180 = por %p178, %p179
      %s181 = ssub.s32 %s21, %s28
      %p182 = scmp.eq.s32.totalorder %s181, 0
      %s184 = sadd.s32 %s183, 1
      %s185 = scalar_select %p182, %s183, %s184
      %p188 = pneg %p182
      %p189 = scmp.eq.s32.totalorder %s21, 1
      %p190 = por %p188, %p189
      %p191 = scmp.ne.s32.totalorder %s183, %s186
      %p192 = scmp.eq.s32.totalorder %s21, 0
      %p193 = por %p191, %p192
      %p194 = scmp.ne.s32.totalorder %s183, %s186
      %p195 = scmp.eq.s32.totalorder %s26, 1
      %p196 = por %p194, %p195
      %p197 = scmp.ne.s32.totalorder %s186, %s187
      %p198 = scmp.eq.s32.totalorder %s26, 0
      %p199 = por %p197, %p198
      %p200 = scmp.ne.s32.totalorder %s186, %s187
      %p201 = scmp.eq.s32.totalorder %s27, 1
      %p202 = por %p200, %p201
      %p204 = scmp.ne.s32.totalorder %s187, %s203
      %p205 = scmp.eq.s32.totalorder %s27, 0
      %p206 = por %p204, %p205
      %p207 = scmp.le.s32.totalorder 1, %s21
      %p208 = scmp.lt.s32.totalorder %s21, 3
      %p209 = pnand %p207, %p208
      %p210 = pneg %p209
      // Predicated region
      $region9: #{tpu_custom_call.1} parent=5 // pred_check
        _
      $region10: #{tpu_custom_call.1} parent=5 // pred_check_branch
        %212 = sbr.rel (%p209) target = $region12
      $region11: #{tpu_custom_call.1} parent=5 // pred_region
        %s213 = ssub.s32 %s21, 1
        // Predicated region
        $region13: #{tpu_custom_call.1} parent=11 // pred_check
          %p214 = pneg %p68
        $region14: #{tpu_custom_call.1} parent=11 // pred_check_branch
          %216 = sbr.rel (%p214) target = $region16
        $region15: #{tpu_custom_call.1} parent=11 // pred_region
          %s218 = ssub.s32 768, 768
          %219 = vsyncadd [#allocation6], %s218
          %s220 = sshll.u32 [#allocation5], 4
          %s221 = int_to_ptr.vmem [resolvable:$true] %s220
          %226 = dma.hbm_to_vmem [thread:$0]  %s1, 768, %s221, [#allocation6], 128, 128, 8
        $region16: #{tpu_custom_call.1} parent=11 // pred_fallthru
          _
        // Predicated region
        $region17: #{tpu_custom_call.1} parent=11 // pred_check
          %p227 = pneg %p89
        $region18: #{tpu_custom_call.1} parent=11 // pred_check_branch
          %229 = sbr.rel (%p227) target = $region20
        $region19: #{tpu_custom_call.1} parent=11 // pred_region
          _
        $region20: #{tpu_custom_call.1} parent=11 // pred_fallthru
          _
        // Predicated region
        $region21: #{tpu_custom_call.1} parent=11 // pred_check
          %p230 = pneg %p110
        $region22: #{tpu_custom_call.1} parent=11 // pred_check_branch
          %232 = sbr.rel (%p230) target = $region24
        $region23: #{tpu_custom_call.1} parent=11 // pred_region
          %s234 = ssub.s32 2048, 2048
          %235 = vsyncadd [#allocation6], %s234
          %s236 = sshll.u32 [#allocation7], 4
          %s237 = int_to_ptr.vmem [resolvable:$true] %s236
          %242 = dma.hbm_to_vmem [thread:$0]  %s3, 2048, %s237, [#allocation6], 128, 128, 8
        $region24: #{tpu_custom_call.1} parent=11 // pred_fallthru
          _
        // Predicated region
        $region25: #{tpu_custom_call.1} parent=11 // pred_check
          %p243 = pneg %p131
        $region26: #{tpu_custom_call.1} parent=11 // pred_check_branch
          %245 = sbr.rel (%p243) target = $region28
        $region27: #{tpu_custom_call.1} parent=11 // pred_region
          _
        $region28: #{tpu_custom_call.1} parent=11 // pred_fallthru
          _
        // Predicated region
        $region29: #{tpu_custom_call.1} parent=11 // pred_check
          %p246 = pneg %p152
        $region30: #{tpu_custom_call.1} parent=11 // pred_check_branch
          %248 = sbr.rel (%p246) target = $region32
        $region31: #{tpu_custom_call.1} parent=11 // pred_region
          %s250 = ssub.s32 2048, 2048
          %251 = vsyncadd [#allocation9], %s250
          %s252 = sshll.u32 [#allocation8], 4
          %s253 = int_to_ptr.vmem [resolvable:$true] %s252
          %258 = dma.hbm_to_vmem [thread:$0]  %s5, 2048, %s253, [#allocation9], 128, 128, 8
        $region32: #{tpu_custom_call.1} parent=11 // pred_fallthru
          _
        // Predicated region
        $region33: #{tpu_custom_call.1} parent=11 // pred_check
          %p259 = pneg %p173
        $region34: #{tpu_custom_call.1} parent=11 // pred_check_branch
          %261 = sbr.rel (%p259) target = $region36
        $region35: #{tpu_custom_call.1} parent=11 // pred_region
          _
        $region36: #{tpu_custom_call.1} parent=11 // pred_fallthru
          _
      $region12: #{tpu_custom_call.1} parent=5 // pred_fallthru
        _
      %p262 = scmp.lt.s32.totalorder %s21, 2
      // Predicated region
      $region37: #{tpu_custom_call.1} parent=5 // pred_check
        %p263 = pneg %p262
      $region38: #{tpu_custom_call.1} parent=5 // pred_check_branch
        %265 = sbr.rel (%p263) target = $region40
      $region39: #{tpu_custom_call.1} parent=5 // pred_region
        // Predicated region
        $region41: #{tpu_custom_call.1} parent=39 // pred_check
          %p266 = pneg %p41
        $region42: #{tpu_custom_call.1} parent=39 // pred_check_branch
          %268 = sbr.rel (%p266) target = $region44
        $region43: #{tpu_custom_call.1} parent=39 // pred_region
          %s269 = sand.u32 %s31, 1
          %s270 = scalar_lea.sflag [#allocation3], %s269
          %s271 = sand.u32 %s31, 1
          %s272 = smul.addr %s271, 16
          %s273 = scalar_lea.vmem [#allocation2], %s272
          %s274 = smul.u32 2, %s21
          %s276 = ssub.s32 256, 256
          %277 = vsyncadd %s270, %s276
          %s278 = smul.addr %s274, 128
          %s279 = scalar_lea.hbm %s0, %s278
          %s280 = sshll.u32 %s273, 4
          %s281 = int_to_ptr.vmem [resolvable:$true] %s280
          %286 = dma.hbm_to_vmem [thread:$0]  %s279, 256, %s281, %s270, 128, 128, 8
        $region44: #{tpu_custom_call.1} parent=39 // pred_fallthru
          _
      $region40: #{tpu_custom_call.1} parent=5 // pred_fallthru
        _
      %p287 = scmp.le.s32.totalorder 1, %s21
      %p288 = scmp.lt.s32.totalorder %s21, 3
      %p289 = pnand %p287, %p288
      %p290 = pneg %p289
      // Predicated region
      $region45: #{tpu_custom_call.1} parent=5 // pred_check
        _
      $region46: #{tpu_custom_call.1} parent=5 // pred_check_branch
        %292 = sbr.rel (%p289) target = $region48
      $region47: #{tpu_custom_call.1} parent=5 // pred_region
        %s293 = ssub.s32 %s21, 1
        %s294 = sand.u32 %s34, 1
        %s295 = scalar_lea.sflag [#allocation3], %s294
        %s296 = sand.u32 %s34, 1
        %s297 = smul.addr %s296, 16
        %s298 = scalar_lea.vmem [#allocation2], %s297
        // Predicated region
        $region49: #{tpu_custom_call.1} parent=47 // pred_check
          %p299 = pneg %p47
        $region50: #{tpu_custom_call.1} parent=47 // pred_check_branch
          %301 = sbr.rel (%p299) target = $region52
        $region51: #{tpu_custom_call.1} parent=47 // pred_region
          %302 = dma.done %s295, 256
        $region52: #{tpu_custom_call.1} parent=47 // pred_fallthru
          _
        // Predicated region
        $region53: #{tpu_custom_call.1} parent=47 // pred_check
          %p303 = pneg %p68
        $region54: #{tpu_custom_call.1} parent=47 // pred_check_branch
          %305 = sbr.rel (%p303) target = $region56
        $region55: #{tpu_custom_call.1} parent=47 // pred_region
          %306 = dma.done [#allocation6], 768
        $region56: #{tpu_custom_call.1} parent=47 // pred_fallthru
          _
        // Predicated region
        $region57: #{tpu_custom_call.1} parent=47 // pred_check
          %p307 = pneg %p110
        $region58: #{tpu_custom_call.1} parent=47 // pred_check_branch
          %309 = sbr.rel (%p307) target = $region60
        $region59: #{tpu_custom_call.1} parent=47 // pred_region
          %310 = dma.done [#allocation6], 2048
        $region60: #{tpu_custom_call.1} parent=47 // pred_fallthru
          _
        // Predicated region
        $region61: #{tpu_custom_call.1} parent=47 // pred_check
          %p311 = pneg %p152
        $region62: #{tpu_custom_call.1} parent=47 // pred_check_branch
          %313 = sbr.rel (%p311) target = $region64
        $region63: #{tpu_custom_call.1} parent=47 // pred_region
          %314 = dma.done [#allocation9], 2048
        $region64: #{tpu_custom_call.1} parent=47 // pred_fallthru
          _
        %s315 = sand.u32 %s34, 1
        %s316 = scalar_lea.sflag [#allocation3], %s315
        %s317 = sand.u32 %s34, 1
        %s318 = smul.addr %s317, 16
        %s319 = scalar_lea.vmem [#allocation2], %s318
        %p320 = pneg %p47
        %p321 = pneg %p44
        %p322 = pneg %p68
        %p323 = pneg %p65
        %p324 = pneg %p89
        %p325 = pneg %p86
        %p326 = pneg %p110
        %p327 = pneg %p107
        %p328 = pneg %p131
        %p329 = pneg %p128
        %p330 = pneg %p152
        %p331 = pneg %p149
        %p332 = pneg %p173
        %p333 = pneg %p170
        %p334 = pneg %p199
        %p335 = pneg %p196
        %s336 = sand.u32 %s186, 1
        %s337 = scalar_lea.sflag [#allocation4], %s336
        %s338 = sand.u32 %s186, 1
        %s339 = smul.addr %s338, 16
        %s340 = scalar_lea.vmem [#allocation10], %s339
        %s341 = smul.u32 2, %s26
        %s342 = smul.u32 2, %s26
        %v343 = vld [vmem:[%s298] sm:$0xff]
        %v344 = vld [vmem:[%s298 + $0x8] sm:$0xff]
        %v345 = vld [vmem:[#allocation5] sm:$0xff]
        %v346 = vld [vmem:[#allocation5 + $0x8] sm:$0xff]
        %v347 = vld [vmem:[#allocation5 + $0x10] sm:$0xff]
        %v348 = vld [vmem:[#allocation5 + $0x18] sm:$0xff]
        %v349 = vld [vmem:[#allocation5 + $0x20] sm:$0xff]
        %v350 = vld [vmem:[#allocation5 + $0x28] sm:$0x3]
        %v351 = vld [vmem:[%s2] sm:$0x1]
        %v353 = vlaneseq
        %v354 = vshrl.u32 %v353, 7
        %v355 = vsub.s32 0, %v354
        %v356 = vrot.slane %v351, %v355
        %vm358 = vcmask 343040
        %v360 = vsel %vm358, %v343, 0
        %v363 = vsel %vm358, %v344, 0
        %vm365 = vcmask 1041408
        %v367 = vsel %vm365, %v350, 0
        %369 = vmatprep.subr.mxu0 0.0
        %370 = vmatpush1.msra.mxu0 %v345
        %371 = vmatprep.subr.mxu0 0.0
        %372 = vmatpush1.msra.mxu0 %v346
        %373 = vmatprep.subr.mxu0 0.0
        %374 = vmatpush1.msra.mxu0 %v347
        %375 = vmatprep.subr.mxu0 0.0
        %376 = vmatpush1.msra.mxu0 %v348
        %377 = vmatprep.subr.mxu0 0.0
        %378 = vmatpush1.msra.mxu0 %v349
        %379 = vmatprep.subr.mxu0 0.0
        %380 = vmatpush1.msra.mxu0 %v367
        %381 = vmatprep.subr.mxu0 0.0
        %382 = vmatpush1.msra.mxu0 0.0
        %383 = vmatprep.subr.mxu0 0.0
        %384 = vmatpush1.msra.mxu0 0.0
        %385 = vmatprep.subr.mxu0 0.0
        %386 = vmatpush1.msra.mxu0 0.0
        %387 = vmatprep.subr.mxu0 0.0
        %388 = vmatpush1.msra.mxu0 0.0
        %389 = vmatprep.subr.mxu0 0.0
        %390 = vmatpush1.msra.mxu0 0.0
        %391 = vmatprep.subr.mxu0 0.0
        %392 = vmatpush1.msra.mxu0 0.0
        %393 = vmatprep.subr.mxu0 0.0
        %394 = vmatpush1.msra.mxu0 0.0
        %395 = vmatprep.subr.mxu0 0.0
        %396 = vmatpush1.msra.mxu0 0.0
        %397 = vmatprep.subr.mxu0 0.0
        %398 = vmatpush1.msra.mxu0 0.0
        %399 = vmatprep.subr.mxu0 0.0
        %400 = vmatpush1.msra.mxu0 0.0
        %401 = vmatprep.subr.mxu0 0.0
        %402 = vmatpush1.msra.mxu0 0.0
        %403 = vmatprep.subr.mxu0 0.0
        %404 = vmatpush1.msra.mxu0 0.0
        %405 = vmatprep.subr.mxu0 0.0
        %406 = vmatpush1.msra.mxu0 0.0
        %407 = vmatprep.subr.mxu0 0.0
        %408 = vmatpush1.msra.mxu0 0.0
        %409 = vmatprep.subr.mxu0 0.0
        %410 = vmatpush1.msra.mxu0 0.0
        %411 = vmatprep.subr.mxu0 0.0
        %412 = vmatpush1.msra.mxu0 0.0
        %413 = vmatprep.subr.mxu0 0.0
        %414 = vmatpush1.msra.mxu0 0.0
        %415 = vmatprep.subr.mxu0 0.0
        %416 = vmatpush1.msra.mxu0 0.0
        %417 = vmatprep.subr.mxu0 0.0
        %418 = vmatpush1.msra.mxu0 0.0
        %419 = vmatprep.subr.mxu0 0.0
        %420 = vmatpush1.msra.mxu0 0.0
        %421 = vmatprep.subr.mxu0 0.0
        %422 = vmatpush1.msra.mxu0 0.0
        %423 = vmatprep.subr.mxu0 0.0
        %424 = vmatpush1.msra.mxu0 0.0
        %425 = vmatprep.subr.mxu0 0.0
        %426 = vmatpush1.msra.mxu0 0.0
        %427 = vmatprep.subr.mxu0 0.0
        %428 = vmatpush1.msra.mxu0 0.0
        %429 = vmatprep.subr.mxu0 0.0
        %430 = vmatpush1.msra.mxu0 0.0
        %431 = vmatprep.subr.mxu0 0.0
        %432 = vmatpush1.msra.mxu0 0.0
        %433 = vmatprep.mubr.f32.mxu0 0.0
        %434 = vmatmul.mubr.f32.gmra.mrb[0].mxu0 %v360
        %v435 = vpop.f32.mrb[0].mxu0
        %v436 = vadd.f32 %v356, %v435
        %v437 = vpop.f32.mrb[0].mxu0
        %438 = vmatprep.mubr.f32.mxu0 0.0
        %439 = vmatmul.mubr.f32.gmra.mrb[0].mxu0 %v363
        %v440 = vpop.f32.mrb[0].mxu0
        %v441 = vadd.f32 %v356, %v440
        %v442 = vpop.f32.mrb[0].mxu0
        %443 = vdwg.mxu0
        %v444 = vmax.f32 %v436, 0.0
        %v445 = vmax.f32 %v441, 0.0
        %v446 = vld [vmem:[#allocation7] sm:$0xff]
        %v447 = vld [vmem:[#allocation7 + $0x8] sm:$0xff]
        %v448 = vld [vmem:[#allocation7 + $0x10] sm:$0xff]
        %v449 = vld [vmem:[#allocation7 + $0x18] sm:$0xff]
        %v450 = vld [vmem:[#allocation7 + $0x20] sm:$0xff]
        %v451 = vld [vmem:[#allocation7 + $0x28] sm:$0xff]
        %v452 = vld [vmem:[#allocation7 + $0x30] sm:$0xff]
        %v453 = vld [vmem:[#allocation7 + $0x38] sm:$0xff]
        %v454 = vld [vmem:[#allocation7 + $0x40] sm:$0xff]
        %v455 = vld [vmem:[#allocation7 + $0x48] sm:$0xff]
        %v456 = vld [vmem:[#allocation7 + $0x50] sm:$0xff]
        %v457 = vld [vmem:[#allocation7 + $0x58] sm:$0xff]
        %v458 = vld [vmem:[#allocation7 + $0x60] sm:$0xff]
        %v459 = vld [vmem:[#allocation7 + $0x68] sm:$0xff]
        %v460 = vld [vmem:[#allocation7 + $0x70] sm:$0xff]
        %v461 = vld [vmem:[#allocation7 + $0x78] sm:$0xff]
        %v462 = vld [vmem:[%s4] sm:$0x1]
        %v464 = vlaneseq
        %v465 = vshrl.u32 %v464, 7
        %v466 = vsub.s32 0, %v465
        %v467 = vrot.slane %v462, %v466
        %469 = vmatprep.subr.mxu0 0.0
        %470 = vmatpush1.msra.mxu0 %v446
        %471 = vmatprep.subr.mxu0 0.0
        %472 = vmatpush1.msra.mxu0 %v447
        %473 = vmatprep.subr.mxu0 0.0
        %474 = vmatpush1.msra.mxu0 %v448
        %475 = vmatprep.subr.mxu0 0.0
        %476 = vmatpush1.msra.mxu0 %v449
        %477 = vmatprep.subr.mxu0 0.0
        %478 = vmatpush1.msra.mxu0 %v450
        %479 = vmatprep.subr.mxu0 0.0
        %480 = vmatpush1.msra.mxu0 %v451
        %481 = vmatprep.subr.mxu0 0.0
        %482 = vmatpush1.msra.mxu0 %v452
        %483 = vmatprep.subr.mxu0 0.0
        %484 = vmatpush1.msra.mxu0 %v453
        %485 = vmatprep.subr.mxu0 0.0
        %486 = vmatpush1.msra.mxu0 %v454
        %487 = vmatprep.subr.mxu0 0.0
        %488 = vmatpush1.msra.mxu0 %v455
        %489 = vmatprep.subr.mxu0 0.0
        %490 = vmatpush1.msra.mxu0 %v456
        %491 = vmatprep.subr.mxu0 0.0
        %492 = vmatpush1.msra.mxu0 %v457
        %493 = vmatprep.subr.mxu0 0.0
        %494 = vmatpush1.msra.mxu0 %v458
        %495 = vmatprep.subr.mxu0 0.0
        %496 = vmatpush1.msra.mxu0 %v459
        %497 = vmatprep.subr.mxu0 0.0
        %498 = vmatpush1.msra.mxu0 %v460
        %499 = vmatprep.subr.mxu0 0.0
        %500 = vmatpush1.msra.mxu0 %v461
        %501 = vmatprep.subr.mxu0 0.0
        %502 = vmatpush1.msra.mxu0 0.0
        %503 = vmatprep.subr.mxu0 0.0
        %504 = vmatpush1.msra.mxu0 0.0
        %505 = vmatprep.subr.mxu0 0.0
        %506 = vmatpush1.msra.mxu0 0.0
        %507 = vmatprep.subr.mxu0 0.0
        %508 = vmatpush1.msra.mxu0 0.0
        %509 = vmatprep.subr.mxu0 0.0
        %510 = vmatpush1.msra.mxu0 0.0
        %511 = vmatprep.subr.mxu0 0.0
        %512 = vmatpush1.msra.mxu0 0.0
        %513 = vmatprep.subr.mxu0 0.0
        %514 = vmatpush1.msra.mxu0 0.0
        %515 = vmatprep.subr.mxu0 0.0
        %516 = vmatpush1.msra.mxu0 0.0
        %517 = vmatprep.subr.mxu0 0.0
        %518 = vmatpush1.msra.mxu0 0.0
        %519 = vmatprep.subr.mxu0 0.0
        %520 = vmatpush1.msra.mxu0 0.0
        %521 = vmatprep.subr.mxu0 0.0
        %522 = vmatpush1.msra.mxu0 0.0
        %523 = vmatprep.subr.mxu0 0.0
        %524 = vmatpush1.msra.mxu0 0.0
        %525 = vmatprep.subr.mxu0 0.0
        %526 = vmatpush1.msra.mxu0 0.0
        %527 = vmatprep.subr.mxu0 0.0
        %528 = vmatpush1.msra.mxu0 0.0
        %529 = vmatprep.subr.mxu0 0.0
        %530 = vmatpush1.msra.mxu0 0.0
        %531 = vmatprep.subr.mxu0 0.0
        %532 = vmatpush1.msra.mxu0 0.0
        %533 = vmatprep.mubr.f32.mxu0 0.0
        %534 = vmatmul.mubr.f32.gmra.mrb[0].mxu0 %v444
        %v535 = vpop.f32.mrb[0].mxu0
        %v536 = vadd.f32 %v467, %v535
        %v537 = vpop.f32.mrb[0].mxu0
        %538 = vmatprep.mubr.f32.mxu0 0.0
        %539 = vmatmul.mubr.f32.gmra.mrb[0].mxu0 %v445
        %v540 = vpop.f32.mrb[0].mxu0
        %v541 = vadd.f32 %v467, %v540
        %v542 = vpop.f32.mrb[0].mxu0
        %543 = vdwg.mxu0
        %v544 = vmax.f32 %v536, 0.0
        %v545 = vmax.f32 %v541, 0.0
        %v546 = vld [vmem:[#allocation8] sm:$0xff]
        %v547 = vld [vmem:[#allocation8 + $0x8] sm:$0xff]
        %v548 = vld [vmem:[#allocation8 + $0x10] sm:$0xff]
        %v549 = vld [vmem:[#allocation8 + $0x18] sm:$0xff]
        %v550 = vld [vmem:[#allocation8 + $0x20] sm:$0xff]
        %v551 = vld [vmem:[#allocation8 + $0x28] sm:$0xff]
        %v552 = vld [vmem:[#allocation8 + $0x30] sm:$0xff]
        %v553 = vld [vmem:[#allocation8 + $0x38] sm:$0xff]
        %v554 = vld [vmem:[#allocation8 + $0x40] sm:$0xff]
        %v555 = vld [vmem:[#allocation8 + $0x48] sm:$0xff]
        %v556 = vld [vmem:[#allocation8 + $0x50] sm:$0xff]
        %v557 = vld [vmem:[#allocation8 + $0x58] sm:$0xff]
        %v558 = vld [vmem:[#allocation8 + $0x60] sm:$0xff]
        %v559 = vld [vmem:[#allocation8 + $0x68] sm:$0xff]
        %v560 = vld [vmem:[#allocation8 + $0x70] sm:$0xff]
        %v561 = vld [vmem:[#allocation8 + $0x78] sm:$0xff]
        %v562 = vld [vmem:[%s6] sm:$0x1]
        %v564 = vlaneseq
        %v565 = vshrl.u32 %v564, 7
        %v566 = vsub.s32 0, %v565
        %v567 = vrot.slane %v562, %v566
        %569 = vmatprep.subr.mxu0 0.0
        %570 = vmatpush1.msra.mxu0 %v546
        %571 = vmatprep.subr.mxu0 0.0
        %572 = vmatpush1.msra.mxu0 %v547
        %573 = vmatprep.subr.mxu0 0.0
        %574 = vmatpush1.msra.mxu0 %v548
        %575 = vmatprep.subr.mxu0 0.0
        %576 = vmatpush1.msra.mxu0 %v549
        %577 = vmatprep.subr.mxu0 0.0
        %578 = vmatpush1.msra.mxu0 %v550
        %579 = vmatprep.subr.mxu0 0.0
        %580 = vmatpush1.msra.mxu0 %v551
        %581 = vmatprep.subr.mxu0 0.0
        %582 = vmatpush1.msra.mxu0 %v552
        %583 = vmatprep.subr.mxu0 0.0
        %584 = vmatpush1.msra.mxu0 %v553
        %585 = vmatprep.subr.mxu0 0.0
        %586 = vmatpush1.msra.mxu0 %v554
        %587 = vmatprep.subr.mxu0 0.0
        %588 = vmatpush1.msra.mxu0 %v555
        %589 = vmatprep.subr.mxu0 0.0
        %590 = vmatpush1.msra.mxu0 %v556
        %591 = vmatprep.subr.mxu0 0.0
        %592 = vmatpush1.msra.mxu0 %v557
        %593 = vmatprep.subr.mxu0 0.0
        %594 = vmatpush1.msra.mxu0 %v558
        %595 = vmatprep.subr.mxu0 0.0
        %596 = vmatpush1.msra.mxu0 %v559
        %597 = vmatprep.subr.mxu0 0.0
        %598 = vmatpush1.msra.mxu0 %v560
        %599 = vmatprep.subr.mxu0 0.0
        %600 = vmatpush1.msra.mxu0 %v561
        %601 = vmatprep.subr.mxu0 0.0
        %602 = vmatpush1.msra.mxu0 0.0
        %603 = vmatprep.subr.mxu0 0.0
        %604 = vmatpush1.msra.mxu0 0.0
        %605 = vmatprep.subr.mxu0 0.0
        %606 = vmatpush1.msra.mxu0 0.0
        %607 = vmatprep.subr.mxu0 0.0
        %608 = vmatpush1.msra.mxu0 0.0
        %609 = vmatprep.subr.mxu0 0.0
        %610 = vmatpush1.msra.mxu0 0.0
        %611 = vmatprep.subr.mxu0 0.0
        %612 = vmatpush1.msra.mxu0 0.0
        %613 = vmatprep.subr.mxu0 0.0
        %614 = vmatpush1.msra.mxu0 0.0
        %615 = vmatprep.subr.mxu0 0.0
        %616 = vmatpush1.msra.mxu0 0.0
        %617 = vmatprep.subr.mxu0 0.0
        %618 = vmatpush1.msra.mxu0 0.0
        %619 = vmatprep.subr.mxu0 0.0
        %620 = vmatpush1.msra.mxu0 0.0
        %621 = vmatprep.subr.mxu0 0.0
        %622 = vmatpush1.msra.mxu0 0.0
        %623 = vmatprep.subr.mxu0 0.0
        %624 = vmatpush1.msra.mxu0 0.0
        %625 = vmatprep.subr.mxu0 0.0
        %626 = vmatpush1.msra.mxu0 0.0
        %627 = vmatprep.subr.mxu0 0.0
        %628 = vmatpush1.msra.mxu0 0.0
        %629 = vmatprep.subr.mxu0 0.0
        %630 = vmatpush1.msra.mxu0 0.0
        %631 = vmatprep.subr.mxu0 0.0
        %632 = vmatpush1.msra.mxu0 0.0
        %633 = vmatprep.mubr.f32.mxu0 0.0
        %634 = vmatmul.mubr.f32.gmra.mrb[0].mxu0 %v544
        %v635 = vpop.f32.mrb[0].mxu0
        %v636 = vadd.f32 %v567, %v635
        %v637 = vpop.f32.mrb[0].mxu0
        %638 = vmatprep.mubr.f32.mxu0 0.0
        %639 = vmatmul.mubr.f32.gmra.mrb[0].mxu0 %v545
        %v640 = vpop.f32.mrb[0].mxu0
        %v641 = vadd.f32 %v567, %v640
        %v642 = vpop.f32.mrb[0].mxu0
        %643 = vdwg.mxu0
        %644 = vst [vmem:[%s340] sm:$0xff] %v636
        %645 = vst [vmem:[%s340 + $0x8] sm:$0xff] %v641
        %s646 = sand.u32 %s186, 1
        %s647 = scalar_lea.sflag [#allocation4], %s646
        %s648 = sand.u32 %s186, 1
        %s649 = smul.addr %s648, 16
        %s650 = scalar_lea.vmem [#allocation10], %s649
        // Predicated region
        $region65: #{tpu_custom_call.1} parent=47 // pred_check
          %p651 = pneg %p196
        $region66: #{tpu_custom_call.1} parent=47 // pred_check_branch
          %653 = sbr.rel (%p651) target = $region68
        $region67: #{tpu_custom_call.1} parent=47 // pred_region
          %s654 = smul.u32 2, %s26
          %s656 = ssub.s32 256, 256
          %657 = vsyncadd %s647, %s656
          %s658 = smul.addr %s654, 128
          %s659 = scalar_lea.hbm %s7, %s658
          %s660 = sshll.u32 %s650, 4
          %s661 = int_to_ptr.vmem [resolvable:$true] %s660
          %666 = dma.vmem_to_hbm [thread:$0]  %s661, 256, %s659, %s647, 128, 128, 8
        $region68: #{tpu_custom_call.1} parent=47 // pred_fallthru
          _
      $region48: #{tpu_custom_call.1} parent=5 // pred_fallthru
        _
      %p667 = scmp.le.s32.totalorder 2, %s21
      // Predicated region
      $region69: #{tpu_custom_call.1} parent=5 // pred_check
        %p668 = pneg %p667
      $region70: #{tpu_custom_call.1} parent=5 // pred_check_branch
        %670 = sbr.rel (%p668) target = $region72
      $region71: #{tpu_custom_call.1} parent=5 // pred_region
        %s671 = ssub.s32 %s21, 2
        // Predicated region
        $region73: #{tpu_custom_call.1} parent=71 // pred_check
          %p672 = pneg %p202
        $region74: #{tpu_custom_call.1} parent=71 // pred_check_branch
          %674 = sbr.rel (%p672) target = $region76
        $region75: #{tpu_custom_call.1} parent=71 // pred_region
          %s675 = sand.u32 %s187, 1
          %s676 = scalar_lea.sflag [#allocation4], %s675
          %s677 = sand.u32 %s187, 1
          %s678 = smul.addr %s677, 16
          %s679 = scalar_lea.vmem [#allocation10], %s678
          %680 = dma.done %s676, 256
        $region76: #{tpu_custom_call.1} parent=71 // pred_fallthru
          _
      $region72: #{tpu_custom_call.1} parent=5 // pred_fallthru
        _
    $region6: #{tpu_custom_call.1} parent=1 // loop_footer
      %s25 = sadd.s32 1, %s21
    $region7: #{tpu_custom_call.1} parent=1 // loop_footer_branch
      %20 = sbr.rel target = $region3
    $region8: #{tpu_custom_call.1} parent=1 // loop_exit
      _
    %681 = vsyncpa [#allocation3], 1
    %s682 = scalar_lea.sflag [#allocation3], 1
    %683 = vsyncpa %s682, 1
    %684 = vsyncpa [#allocation6], 1
    %685 = vsyncpa [#allocation9], 1
    %686 = vsyncpa [#allocation4], 1
    %s687 = scalar_lea.sflag [#allocation4], 1
    %688 = vsyncpa %s687, 1

</llo_original>
